<compile_context>
chip_gen: v7x
topology: tpu7x:2x2x1
jax: 0.10.0
libtpu: 0.0.40
codegen_flags: <defaults>
</compile_context>

<pallas_src>
import jax
import jax.numpy as jnp
from jax.experimental import pallas as pl
from jax.experimental.pallas import tpu as pltpu

EPS = 1e-8


def dain_kernel(x_ref, wm_ref, ws_ref, wg_ref, bg_ref, o_ref):
    # x_ref: (bB, T, D) block of the input.
    x = x_ref[...].astype(jnp.float32)                     # (bB, T, D)
    T = x.shape[1]
    inv_t = jnp.float32(1.0 / T)

    # ---- single statistics pass over T ----
    avg = jnp.sum(x, axis=1) * inv_t                       # (bB, D)  E[x]
    ex2 = jnp.sum(x * x, axis=1) * inv_t                   # (bB, D)  E[x^2]

    # ---- adaptive mean (mean_layer, no bias, identity init) ----
    a_avg = jnp.dot(avg, wm_ref[...],
                    preferred_element_type=jnp.float32)    # (bB, D)

    # ---- adaptive scaling (scaling_layer, no bias, identity init) ----
    # mean((x - a_avg)^2) = E[x^2] - 2*a_avg*E[x] + a_avg^2
    var = ex2 - 2.0 * a_avg * avg + a_avg * a_avg
    std = jnp.sqrt(jnp.maximum(var, 0.0) + EPS)            # (bB, D)
    a_std = jnp.dot(std, ws_ref[...],
                    preferred_element_type=jnp.float32)    # (bB, D)
    # adaptive_std[adaptive_std <= eps] = 1
    a_std = jnp.where(a_std <= EPS, jnp.float32(1.0), a_std)
    inv_std = pl.reciprocal(a_std, approx=False)           # (bB, D), EUP slot

    # ---- gating (gating_layer with bias, sigmoid) ----
    # mean over T of the normalized tensor == (avg - a_avg) / a_std
    avg2 = (avg - a_avg) * inv_std                         # (bB, D)
    gate = jax.nn.sigmoid(
        jnp.dot(avg2, wg_ref[...], preferred_element_type=jnp.float32)
        + bg_ref[...])                                     # (bB, D)

    # ---- single fused elementwise output pass ----
    scale = (inv_std * gate)[:, None, :]                   # (bB, 1, D)
    shift = a_avg[:, None, :]                              # (bB, 1, D)
    o_ref[...] = ((x - shift) * scale).astype(o_ref.dtype)


def _pick_batch_block(B, T, D, budget_bytes=8 << 20):
    """Largest divisor of B (capped at 128) whose double-buffered f32
    input + output blocks stay under `budget_bytes` of VMEM."""
    per_b = 16 * T * D  # 2x in-buffers + 2x out-buffers, 4 bytes/elem
    cap = max(1, min(128, budget_bytes // per_b))
    bb = 1
    for cand in range(1, min(B, cap) + 1):
        if B % cand == 0:
            bb = cand
    return bb


def dain_forward(x, w_mean, w_scale, w_gate, b_gate):
    """x: (B, T, D). Weights are PyTorch-style (out, in); bias (D,)."""
    B, T, D = x.shape
    bb = _pick_batch_block(B, T, D)

    # PyTorch Linear computes v @ W.T ; pre-transpose weights for the kernel.
    wm_t = jnp.asarray(w_mean).T
    ws_t = jnp.asarray(w_scale).T
    wg_t = jnp.asarray(w_gate).T
    bg = jnp.asarray(b_gate).reshape(1, D)

    return pl.pallas_call(
        dain_kernel,
        out_shape=jax.ShapeDtypeStruct((B, T, D), x.dtype),
        grid_spec=pltpu.PrefetchScalarGridSpec(
            num_scalar_prefetch=0,
            grid=(B // bb,),
            in_specs=[
                pl.BlockSpec((bb, T, D), lambda b: (b, 0, 0)),  # x (bB rows)
                pl.BlockSpec((D, D), lambda b: (0, 0)),         # W_mean^T
                pl.BlockSpec((D, D), lambda b: (0, 0)),         # W_scale^T
                pl.BlockSpec((D, D), lambda b: (0, 0)),         # W_gate^T
                pl.BlockSpec((1, D), lambda b: (0, 0)),         # b_gate
            ],
            out_specs=pl.BlockSpec((bb, T, D), lambda b: (b, 0, 0)),
        ),
        compiler_params=pltpu.CompilerParams(
            dimension_semantics=("parallel",)),
    )(x, wm_t, ws_t, wg_t, bg)


def dain_reference(x, w_mean, w_scale, w_gate, b_gate):
    """Pure-JAX reference mirroring the PyTorch forward exactly."""
    avg = jnp.mean(x, axis=1, keepdims=True)
    a_avg = avg @ w_mean.T
    x = x - a_avg
    std = jnp.sqrt(jnp.mean(x ** 2, axis=1, keepdims=True) + EPS)
    a_std = std @ w_scale.T
    a_std = jnp.where(a_std <= EPS, 1.0, a_std)
    x = x / a_std
    avg2 = jnp.mean(x, axis=1, keepdims=True)
    gate = jax.nn.sigmoid(avg2 @ w_gate.T + b_gate)
    return x * gate


if __name__ == "__main__":
    B, T, D = 2, 8, 32   # batch=2, seq=8, feature_dim=32
    key = jax.random.PRNGKey(0)
    kx, kw, kb = jax.random.split(key, 3)

    x = jax.random.normal(kx, (B, T, D), dtype=jnp.float32)

    # Deterministic parameter init matching the module's __init__:
    # mean_layer / scaling_layer weights are identity; gating_layer is a
    # generic Linear -> small deterministic random weights + bias.
    w_mean = jnp.eye(D, dtype=jnp.float32)
    w_scale = jnp.eye(D, dtype=jnp.float32)
    w_gate = 0.1 * jax.random.normal(kw, (D, D), dtype=jnp.float32)
    b_gate = 0.1 * jax.random.normal(kb, (D,), dtype=jnp.float32)

    out = dain_forward(x, w_mean, w_scale, w_gate, b_gate)
    out = jax.block_until_ready(out)

    ref = dain_reference(x, w_mean, w_scale, w_gate, b_gate)
    assert out.shape == (B, T, D)
    # Tolerance loosened slightly: single-pass variance + algebraic avg2 +
    # reciprocal-multiply reorder floating point vs the reference.
    assert jnp.allclose(out, ref, atol=1e-4, rtol=1e-4), "mismatch vs reference"
    print("KERNEL_OK")
</pallas_src>

<mosaic_0001>
module attributes {stable_mosaic.version = 11 : i64} {
  func.func @dain_kernel(%arg0: i32, %arg1: memref<2x8x32xf32, #tpu.memory_space<vmem>>, %arg2: memref<32x32xf32, #tpu.memory_space<vmem>>, %arg3: memref<32x32xf32, #tpu.memory_space<vmem>>, %arg4: memref<32x32xf32, #tpu.memory_space<vmem>>, %arg5: memref<1x32xf32, #tpu.memory_space<vmem>>, %arg6: memref<2x8x32xf32, #tpu.memory_space<vmem>>) attributes {dimension_semantics = [#tpu.dimension_semantics<parallel>], iteration_bounds = array<i64: 1>, scalar_prefetch = 0 : i64, scratch_operands = 0 : i64, tpu.core_type = #tpu.core_type<tc>, window_params = [{transform_indices = @transform_0, window_bounds = array<i64: 2, 8, 32>}, {pipeline_mode = #tpu.pipeline_mode<synchronous>, transform_indices = @transform_1, window_bounds = array<i64: 32, 32>}, {pipeline_mode = #tpu.pipeline_mode<synchronous>, transform_indices = @transform_2, window_bounds = array<i64: 32, 32>}, {pipeline_mode = #tpu.pipeline_mode<synchronous>, transform_indices = @transform_3, window_bounds = array<i64: 32, 32>}, {pipeline_mode = #tpu.pipeline_mode<synchronous>, transform_indices = @transform_4, window_bounds = array<i64: 1, 32>}, {transform_indices = @transform_5, window_bounds = array<i64: 2, 8, 32>}]} {
    %c0 = arith.constant 0 : index
    %c0_0 = arith.constant 0 : index
    %c0_1 = arith.constant 0 : index
    %0 = vector.load %arg1[%c0, %c0_0, %c0_1] : memref<2x8x32xf32, #tpu.memory_space<vmem>>, vector<2x8x32xf32>
    %cst = arith.constant dense<0.000000e+00> : vector<2x32xf32>
    %1 = vector.multi_reduction <add>, %0, %cst [1] : vector<2x8x32xf32> to vector<2x32xf32>
    %cst_2 = arith.constant 1.250000e-01 : f32
    %2 = vector.broadcast %cst_2 : f32 to vector<2x32xf32>
    %3 = arith.mulf %1, %2 : vector<2x32xf32>
    %4 = arith.mulf %0, %0 : vector<2x8x32xf32>
    %cst_3 = arith.constant dense<0.000000e+00> : vector<2x32xf32>
    %5 = vector.multi_reduction <add>, %4, %cst_3 [1] : vector<2x8x32xf32> to vector<2x32xf32>
    %cst_4 = arith.constant 1.250000e-01 : f32
    %6 = vector.broadcast %cst_4 : f32 to vector<2x32xf32>
    %7 = arith.mulf %5, %6 : vector<2x32xf32>
    %c0_5 = arith.constant 0 : index
    %c0_6 = arith.constant 0 : index
    %8 = vector.load %arg2[%c0_5, %c0_6] : memref<32x32xf32, #tpu.memory_space<vmem>>, vector<32x32xf32>
    %cst_7 = arith.constant dense<0.000000e+00> : vector<2x32xf32>
    %9 = tpu.matmul %3, %8, %cst_7 {dimension_numbers = #tpu.dot_dimension_numbers<[1], [0], [0], [1], [0, 0, 1, 1], [], []>} : vector<2x32xf32>, vector<32x32xf32>, vector<2x32xf32> -> vector<2x32xf32>
    %cst_8 = arith.constant 2.000000e+00 : f32
    %10 = vector.broadcast %cst_8 : f32 to vector<2x32xf32>
    %11 = arith.mulf %10, %9 : vector<2x32xf32>
    %12 = arith.mulf %11, %3 : vector<2x32xf32>
    %13 = arith.subf %7, %12 : vector<2x32xf32>
    %14 = arith.mulf %9, %9 : vector<2x32xf32>
    %15 = arith.addf %13, %14 : vector<2x32xf32>
    %cst_9 = arith.constant 0.000000e+00 : f32
    %16 = vector.broadcast %cst_9 : f32 to vector<2x32xf32>
    %17 = arith.maximumf %15, %16 : vector<2x32xf32>
    %cst_10 = arith.constant 9.99999993E-9 : f32
    %18 = vector.broadcast %cst_10 : f32 to vector<2x32xf32>
    %19 = arith.addf %17, %18 : vector<2x32xf32>
    %20 = math.sqrt %19 : vector<2x32xf32>
    %c0_11 = arith.constant 0 : index
    %c0_12 = arith.constant 0 : index
    %21 = vector.load %arg3[%c0_11, %c0_12] : memref<32x32xf32, #tpu.memory_space<vmem>>, vector<32x32xf32>
    %cst_13 = arith.constant dense<0.000000e+00> : vector<2x32xf32>
    %22 = tpu.matmul %20, %21, %cst_13 {dimension_numbers = #tpu.dot_dimension_numbers<[1], [0], [0], [1], [0, 0, 1, 1], [], []>} : vector<2x32xf32>, vector<32x32xf32>, vector<2x32xf32> -> vector<2x32xf32>
    %cst_14 = arith.constant 9.99999993E-9 : f32
    %23 = vector.broadcast %cst_14 : f32 to vector<2x32xf32>
    %24 = arith.cmpf ole, %22, %23 : vector<2x32xf32>
    %cst_15 = arith.constant 1.000000e+00 : f32
    %25 = vector.broadcast %cst_15 : f32 to vector<2x32xf32>
    %26 = arith.select %24, %25, %22 : vector<2x32xi1>, vector<2x32xf32>
    %27 = tpu.reciprocal %26 : vector<2x32xf32> -> vector<2x32xf32>
    %28 = arith.subf %3, %9 : vector<2x32xf32>
    %29 = arith.mulf %28, %27 : vector<2x32xf32>
    %c0_16 = arith.constant 0 : index
    %c0_17 = arith.constant 0 : index
    %30 = vector.load %arg4[%c0_16, %c0_17] : memref<32x32xf32, #tpu.memory_space<vmem>>, vector<32x32xf32>
    %cst_18 = arith.constant dense<0.000000e+00> : vector<2x32xf32>
    %31 = tpu.matmul %29, %30, %cst_18 {dimension_numbers = #tpu.dot_dimension_numbers<[1], [0], [0], [1], [0, 0, 1, 1], [], []>} : vector<2x32xf32>, vector<32x32xf32>, vector<2x32xf32> -> vector<2x32xf32>
    %c0_19 = arith.constant 0 : index
    %c0_20 = arith.constant 0 : index
    %32 = vector.load %arg5[%c0_19, %c0_20] : memref<1x32xf32, #tpu.memory_space<vmem>>, vector<1x32xf32>
    %33 = vector.broadcast %32 : vector<1x32xf32> to vector<2x32xf32>
    %34 = arith.addf %31, %33 : vector<2x32xf32>
    %35 = arith.negf %34 : vector<2x32xf32>
    %36 = math.exp %35 : vector<2x32xf32>
    %cst_21 = arith.constant 1.000000e+00 : f32
    %37 = vector.broadcast %cst_21 : f32 to vector<2x32xf32>
    %38 = arith.addf %37, %36 : vector<2x32xf32>
    %39 = arith.divf %37, %38 : vector<2x32xf32>
    %40 = arith.mulf %27, %39 : vector<2x32xf32>
    %41 = vector.shape_cast %40 : vector<2x32xf32> to vector<2x1x32xf32>
    %42 = vector.shape_cast %9 : vector<2x32xf32> to vector<2x1x32xf32>
    %43 = vector.broadcast %42 : vector<2x1x32xf32> to vector<2x8x32xf32>
    %44 = arith.subf %0, %43 : vector<2x8x32xf32>
    %45 = vector.broadcast %41 : vector<2x1x32xf32> to vector<2x8x32xf32>
    %46 = arith.mulf %44, %45 : vector<2x8x32xf32>
    %c0_22 = arith.constant 0 : index
    %c0_23 = arith.constant 0 : index
    %c0_24 = arith.constant 0 : index
    %47 = vector.load %arg6[%c0_22, %c0_23, %c0_24] : memref<2x8x32xf32, #tpu.memory_space<vmem>>, vector<2x8x32xf32>
    tpu.vector_store %arg6[%c0_22, %c0_23, %c0_24], %46 {strides = array<i32>} : memref<2x8x32xf32, #tpu.memory_space<vmem>>, vector<2x8x32xf32>,
    return
  }
  func.func @transform_0(%arg0: i32) -> (i32, i32, i32) {
    %c0_i32 = arith.constant 0 : i32
    %c0_i32_0 = arith.constant 0 : i32
    %c0_i32_1 = arith.constant 0 : i32
    return %arg0, %c0_i32, %c0_i32_0 : i32, i32, i32
  }
  func.func @transform_1(%arg0: i32) -> (i32, i32) {
    %c0_i32 = arith.constant 0 : i32
    %c0_i32_0 = arith.constant 0 : i32
    %c0_i32_1 = arith.constant 0 : i32
    return %c0_i32, %c0_i32_0 : i32, i32
  }
  func.func @transform_2(%arg0: i32) -> (i32, i32) {
    %c0_i32 = arith.constant 0 : i32
    %c0_i32_0 = arith.constant 0 : i32
    %c0_i32_1 = arith.constant 0 : i32
    return %c0_i32, %c0_i32_0 : i32, i32
  }
  func.func @transform_3(%arg0: i32) -> (i32, i32) {
    %c0_i32 = arith.constant 0 : i32
    %c0_i32_0 = arith.constant 0 : i32
    %c0_i32_1 = arith.constant 0 : i32
    return %c0_i32, %c0_i32_0 : i32, i32
  }
  func.func @transform_4(%arg0: i32) -> (i32, i32) {
    %c0_i32 = arith.constant 0 : i32
    %c0_i32_0 = arith.constant 0 : i32
    %c0_i32_1 = arith.constant 0 : i32
    return %c0_i32, %c0_i32_0 : i32, i32
  }
  func.func @transform_5(%arg0: i32) -> (i32, i32, i32) {
    %c0_i32 = arith.constant 0 : i32
    %c0_i32_0 = arith.constant 0 : i32
    %c0_i32_1 = arith.constant 0 : i32
    return %arg0, %c0_i32, %c0_i32_0 : i32, i32, i32
  }
}

</mosaic_0001>

<llo_original>
// kernel: tpu_custom_call.1
$region0: #{tpu_custom_call.1}
  #allocation0 [shape = 'u32[]', space=smem, size = 0x4, offset = 0x4, fixed_abs, tag = 'smem constant byte address 0x4 - core index']
  #allocation1 [shape = 'u32[144,128]{1,0:T(1,128)}', space=vmem, size = 0x12000, scoped, tag = 'internal scratch']
  %s0 = inlined_call_operand.hbm [shape: f32[2,8,32], index: 0, kind: input, shape index: {}]
  %s1 = inlined_call_operand.hbm [shape: f32[32,32], index: 1, kind: input, shape index: {}]
  %s2 = inlined_call_operand.hbm [shape: f32[32,32], index: 2, kind: input, shape index: {}]
  %s3 = inlined_call_operand.hbm [shape: f32[32,32], index: 3, kind: input, shape index: {}]
  %s4 = inlined_call_operand.vmem [shape: f32[1,32], index: 4, kind: input, shape index: {}]
  %s5 = inlined_call_operand.hbm [shape: f32[2,8,32], index: 5, kind: output, shape index: {}]
  %s6 = sld [smem:[#allocation0]]
  $region46: #{tpu_custom_call.1} parent=0
    _
  %s8 = ssub.s32 1, %s6
  %s9 = scalar_select 0, %s8, %s6
  $region1: #{tpu_custom_call.1} parent=0
    #allocation2 [shape = 'u8[8192]{0}', space=vmem, size = 0x2000, scoped, tag = 'input window, operand 0, single buffered']
    #allocation3 [shape = 's32[1]{0}', space=sflag, size = 0x4, scoped, tag = 'scoped memory for tpu_custom_call.1']
    #allocation4 [shape = 's32[1]{0}', space=sflag, size = 0x4, scoped, tag = 'scoped memory for tpu_custom_call.1']
    #allocation5 [shape = 'u8[16384]{0}', space=vmem, size = 0x4000, scoped, tag = 'input window, operand 1, single buffered']
    #allocation6 [shape = 's32[1]{0}', space=sflag, size = 0x4, scoped, tag = 'scoped memory for tpu_custom_call.1']
    #allocation7 [shape = 'u8[16384]{0}', space=vmem, size = 0x4000, scoped, tag = 'input window, operand 2, single buffered']
    #allocation8 [shape = 'u8[16384]{0}', space=vmem, size = 0x4000, scoped, tag = 'input window, operand 3, single buffered']
    #allocation9 [shape = 's32[1]{0}', space=sflag, size = 0x4, scoped, tag = 'scoped memory for tpu_custom_call.1']
    #allocation10 [shape = 'u8[8192]{0}', space=vmem, size = 0x2000, scoped, tag = 'output window, operand 0, single buffered']
    %10 = vsyncpa [#allocation3], 0
    %11 = vsyncpa [#allocation6], 0
    %12 = vsyncpa [#allocation9], 0
    %13 = vsyncpa [#allocation4], 0
    // Predicated region
    $region2: #{tpu_custom_call.1} parent=1 // pred_check
      _
    $region3: #{tpu_custom_call.1} parent=1 // pred_check_branch
      %15 = sbr.rel (0) target = $region5
    $region4: #{tpu_custom_call.1} parent=1 // pred_region
      %s17 = ssub.s32 256, 256
      %18 = vsyncadd [#allocation3], %s17
      %s19 = sshll.u32 [#allocation2], 4
      %s20 = int_to_ptr.vmem [resolvable:$true] %s19
      %25 = dma.hbm_to_vmem [thread:$0]  %s0, 256, %s20, [#allocation3], 128, 128, 8
    $region5: #{tpu_custom_call.1} parent=1 // pred_fallthru
      _
    // Predicated region
    $region6: #{tpu_custom_call.1} parent=1 // pred_check
      _
    $region7: #{tpu_custom_call.1} parent=1 // pred_check_branch
      %27 = sbr.rel (0) target = $region9
    $region8: #{tpu_custom_call.1} parent=1 // pred_region
      %s29 = ssub.s32 512, 512
      %30 = vsyncadd [#allocation6], %s29
      %s31 = sshll.u32 [#allocation5], 4
      %s32 = int_to_ptr.vmem [resolvable:$true] %s31
      %37 = dma.hbm_to_vmem [thread:$0]  %s1, 512, %s32, [#allocation6], 128, 128, 8
    $region9: #{tpu_custom_call.1} parent=1 // pred_fallthru
      _
    // Predicated region
    $region10: #{tpu_custom_call.1} parent=1 // pred_check
      _
    $region11: #{tpu_custom_call.1} parent=1 // pred_check_branch
      %39 = sbr.rel (0) target = $region13
    $region12: #{tpu_custom_call.1} parent=1 // pred_region
      %s41 = ssub.s32 512, 512
      %42 = vsyncadd [#allocation6], %s41
      %s43 = sshll.u32 [#allocation7], 4
      %s44 = int_to_ptr.vmem [resolvable:$true] %s43
      %49 = dma.hbm_to_vmem [thread:$0]  %s2, 512, %s44, [#allocation6], 128, 128, 8
    $region13: #{tpu_custom_call.1} parent=1 // pred_fallthru
      _
    // Predicated region
    $region14: #{tpu_custom_call.1} parent=1 // pred_check
      _
    $region15: #{tpu_custom_call.1} parent=1 // pred_check_branch
      %51 = sbr.rel (0) target = $region17
    $region16: #{tpu_custom_call.1} parent=1 // pred_region
      %s53 = ssub.s32 512, 512
      %54 = vsyncadd [#allocation9], %s53
      %s55 = sshll.u32 [#allocation8], 4
      %s56 = int_to_ptr.vmem [resolvable:$true] %s55
      %61 = dma.hbm_to_vmem [thread:$0]  %s3, 512, %s56, [#allocation9], 128, 128, 8
    $region17: #{tpu_custom_call.1} parent=1 // pred_fallthru
      _
    // Predicated region
    $region18: #{tpu_custom_call.1} parent=1 // pred_check
      _
    $region19: #{tpu_custom_call.1} parent=1 // pred_check_branch
      %63 = sbr.rel (0) target = $region21
    $region20: #{tpu_custom_call.1} parent=1 // pred_region
      _
    $region21: #{tpu_custom_call.1} parent=1 // pred_fallthru
      _
    // Predicated region
    $region22: #{tpu_custom_call.1} parent=1 // pred_check
      _
    $region23: #{tpu_custom_call.1} parent=1 // pred_check_branch
      %65 = sbr.rel (0) target = $region25
    $region24: #{tpu_custom_call.1} parent=1 // pred_region
      %66 = dma.done [#allocation3], 256
    $region25: #{tpu_custom_call.1} parent=1 // pred_fallthru
      _
    // Predicated region
    $region26: #{tpu_custom_call.1} parent=1 // pred_check
      _
    $region27: #{tpu_custom_call.1} parent=1 // pred_check_branch
      %68 = sbr.rel (0) target = $region29
    $region28: #{tpu_custom_call.1} parent=1 // pred_region
      %69 = dma.done [#allocation6], 512
    $region29: #{tpu_custom_call.1} parent=1 // pred_fallthru
      _
    // Predicated region
    $region30: #{tpu_custom_call.1} parent=1 // pred_check
      _
    $region31: #{tpu_custom_call.1} parent=1 // pred_check_branch
      %71 = sbr.rel (0) target = $region33
    $region32: #{tpu_custom_call.1} parent=1 // pred_region
      %72 = dma.done [#allocation6], 512
    $region33: #{tpu_custom_call.1} parent=1 // pred_fallthru
      _
    // Predicated region
    $region34: #{tpu_custom_call.1} parent=1 // pred_check
      _
    $region35: #{tpu_custom_call.1} parent=1 // pred_check_branch
      %74 = sbr.rel (0) target = $region37
    $region36: #{tpu_custom_call.1} parent=1 // pred_region
      %75 = dma.done [#allocation9], 512
    $region37: #{tpu_custom_call.1} parent=1 // pred_fallthru
      _
    %v76 = vld [vmem:[#allocation2] sm:$0xff]
    %v77 = vld [vmem:[#allocation2 + $0x8] sm:$0xff]
    %vm78 = vcmask 261120
    %v79 = vsel %vm78, %v76, 0.0
    %v80 = vrot.slane %v79, 4
    %v81 = vadd.f32 %v79, %v80
    %v82 = vrot.slane %v81, 2
    %v83 = vadd.f32 %v81, %v82
    %v84 = vrot.slane %v83, 1
    %v85 = vadd.f32 %v83, %v84
    %v86 = vsel %vm78, %v77, 0.0
    %v87 = vrot.slane %v86, 4
    %v88 = vadd.f32 %v86, %v87
    %v89 = vrot.slane %v88, 2
    %v90 = vadd.f32 %v88, %v89
    %v91 = vrot.slane %v90, 1
    %v92 = vadd.f32 %v90, %v91
    %v93 = vmul.f32 %v85, 0.125
    %v94 = vmul.f32 %v92, 0.125
    %v95 = vmul.f32 %v76, %v76
    %v96 = vmul.f32 %v77, %v77
    %v97 = vsel %vm78, %v95, 0.0
    %v98 = vrot.slane %v97, 4
    %v99 = vadd.f32 %v97, %v98
    %v100 = vrot.slane %v99, 2
    %v101 = vadd.f32 %v99, %v100
    %v102 = vrot.slane %v101, 1
    %v103 = vadd.f32 %v101, %v102
    %v104 = vsel %vm78, %v96, 0.0
    %v105 = vrot.slane %v104, 4
    %v106 = vadd.f32 %v104, %v105
    %v107 = vrot.slane %v106, 2
    %v108 = vadd.f32 %v106, %v107
    %v109 = vrot.slane %v108, 1
    %v110 = vadd.f32 %v108, %v109
    %v111 = vmul.f32 %v103, 0.125
    %v112 = vmul.f32 %v110, 0.125
    %v113 = vld [vmem:[#allocation5] sm:$0xff]
    %v114 = vld [vmem:[#allocation5 + $0x8] sm:$0xff]
    %v115 = vld [vmem:[#allocation5 + $0x10] sm:$0xff]
    %v116 = vld [vmem:[#allocation5 + $0x18] sm:$0xff]
    %vm119 = vcmask 1041409
    %v120 = vsel %vm119, %v94, %v93
    %v121 = vsel %vm78, %v120, 0
    %123 = vmatprep.subr.mxu0 0.0
    %124 = vmatpush1.msra.mxu0 %v113
    %125 = vmatprep.subr.mxu0 0.0
    %126 = vmatpush1.msra.mxu0 %v114
    %127 = vmatprep.subr.mxu0 0.0
    %128 = vmatpush1.msra.mxu0 %v115
    %129 = vmatprep.subr.mxu0 0.0
    %130 = vmatpush1.msra.mxu0 %v116
    %131 = vmatprep.subr.mxu0 0.0
    %132 = vmatpush1.msra.mxu0 0.0
    %133 = vmatprep.subr.mxu0 0.0
    %134 = vmatpush1.msra.mxu0 0.0
    %135 = vmatprep.subr.mxu0 0.0
    %136 = vmatpush1.msra.mxu0 0.0
    %137 = vmatprep.subr.mxu0 0.0
    %138 = vmatpush1.msra.mxu0 0.0
    %139 = vmatprep.subr.mxu0 0.0
    %140 = vmatpush1.msra.mxu0 0.0
    %141 = vmatprep.subr.mxu0 0.0
    %142 = vmatpush1.msra.mxu0 0.0
    %143 = vmatprep.subr.mxu0 0.0
    %144 = vmatpush1.msra.mxu0 0.0
    %145 = vmatprep.subr.mxu0 0.0
    %146 = vmatpush1.msra.mxu0 0.0
    %147 = vmatprep.subr.mxu0 0.0
    %148 = vmatpush1.msra.mxu0 0.0
    %149 = vmatprep.subr.mxu0 0.0
    %150 = vmatpush1.msra.mxu0 0.0
    %151 = vmatprep.subr.mxu0 0.0
    %152 = vmatpush1.msra.mxu0 0.0
    %153 = vmatprep.subr.mxu0 0.0
    %154 = vmatpush1.msra.mxu0 0.0
    %155 = vmatprep.subr.mxu0 0.0
    %156 = vmatpush1.msra.mxu0 0.0
    %157 = vmatprep.subr.mxu0 0.0
    %158 = vmatpush1.msra.mxu0 0.0
    %159 = vmatprep.subr.mxu0 0.0
    %160 = vmatpush1.msra.mxu0 0.0
    %161 = vmatprep.subr.mxu0 0.0
    %162 = vmatpush1.msra.mxu0 0.0
    %163 = vmatprep.subr.mxu0 0.0
    %164 = vmatpush1.msra.mxu0 0.0
    %165 = vmatprep.subr.mxu0 0.0
    %166 = vmatpush1.msra.mxu0 0.0
    %167 = vmatprep.subr.mxu0 0.0
    %168 = vmatpush1.msra.mxu0 0.0
    %169 = vmatprep.subr.mxu0 0.0
    %170 = vmatpush1.msra.mxu0 0.0
    %171 = vmatprep.subr.mxu0 0.0
    %172 = vmatpush1.msra.mxu0 0.0
    %173 = vmatprep.subr.mxu0 0.0
    %174 = vmatpush1.msra.mxu0 0.0
    %175 = vmatprep.subr.mxu0 0.0
    %176 = vmatpush1.msra.mxu0 0.0
    %177 = vmatprep.subr.mxu0 0.0
    %178 = vmatpush1.msra.mxu0 0.0
    %179 = vmatprep.subr.mxu0 0.0
    %180 = vmatpush1.msra.mxu0 0.0
    %181 = vmatprep.subr.mxu0 0.0
    %182 = vmatpush1.msra.mxu0 0.0
    %183 = vmatprep.subr.mxu0 0.0
    %184 = vmatpush1.msra.mxu0 0.0
    %185 = vmatprep.subr.mxu0 0.0
    %186 = vmatpush1.msra.mxu0 0.0
    %187 = vmatprep.mubr.f32.mxu0 0.0
    %188 = vmatmul.mubr.f32.gmra.mrb[0].mxu0 %v121
    %v189 = vpop.f32.mrb[0].mxu0
    %v190 = vadd.f32 0.0, %v189
    %v191 = vpop.f32.mrb[0].mxu0
    %192 = vdwg.mxu0
    %v193 = vmul.f32 %v190, 2.0
    %v195 = vmul.f32 %v193, %v120
    %v197 = vrot.slane %v195, 1
    %v200 = vsub.f32 %v111, %v195
    %v201 = vsub.f32 %v112, %v197
    %v202 = vmul.f32 %v190, %v190
    %v204 = vrot.slane %v202, 1
    %v207 = vadd.f32 %v200, %v202
    %v208 = vadd.f32 %v201, %v204
    %v209 = vmax.f32 %v207, 0.0
    %v210 = vmax.f32 %v208, 0.0
    %v211 = vadd.f32 %v209, 1e-08
    %v212 = vadd.f32 %v210, 1e-08
    %v213 = vrsqrt.pop %v211
    %v214 = vmul.f32 %v211, %v213
    %vm215 = vcmp.eq.f32.partialorder %v211, inf
    %v216 = vsel %vm215, %v211, %v214
    %vm217 = vcmp.eq.f32.partialorder %v211, 0.0
    %v218 = vand.u32 %v211, 2147483648
    %v219 = vsel %vm217, %v218, %v216
    %v220 = vrsqrt.pop %v212
    %v221 = vmul.f32 %v212, %v220
    %vm222 = vcmp.eq.f32.partialorder %v212, inf
    %v223 = vsel %vm222, %v212, %v221
    %vm224 = vcmp.eq.f32.partialorder %v212, 0.0
    %v225 = vand.u32 %v212, 2147483648
    %v226 = vsel %vm224, %v225, %v223
    %v227 = vld [vmem:[#allocation7] sm:$0xff]
    %v228 = vld [vmem:[#allocation7 + $0x8] sm:$0xff]
    %v229 = vld [vmem:[#allocation7 + $0x10] sm:$0xff]
    %v230 = vld [vmem:[#allocation7 + $0x18] sm:$0xff]
    %v233 = vrot.slane %v226, 7
    %v234 = vsel %vm119, %v233, %v219
    %v235 = vsel %vm78, %v234, 0
    %237 = vmatprep.subr.mxu0 0.0
    %238 = vmatpush1.msra.mxu0 %v227
    %239 = vmatprep.subr.mxu0 0.0
    %240 = vmatpush1.msra.mxu0 %v228
    %241 = vmatprep.subr.mxu0 0.0
    %242 = vmatpush1.msra.mxu0 %v229
    %243 = vmatprep.subr.mxu0 0.0
    %244 = vmatpush1.msra.mxu0 %v230
    %245 = vmatprep.subr.mxu0 0.0
    %246 = vmatpush1.msra.mxu0 0.0
    %247 = vmatprep.subr.mxu0 0.0
    %248 = vmatpush1.msra.mxu0 0.0
    %249 = vmatprep.subr.mxu0 0.0
    %250 = vmatpush1.msra.mxu0 0.0
    %251 = vmatprep.subr.mxu0 0.0
    %252 = vmatpush1.msra.mxu0 0.0
    %253 = vmatprep.subr.mxu0 0.0
    %254 = vmatpush1.msra.mxu0 0.0
    %255 = vmatprep.subr.mxu0 0.0
    %256 = vmatpush1.msra.mxu0 0.0
    %257 = vmatprep.subr.mxu0 0.0
    %258 = vmatpush1.msra.mxu0 0.0
    %259 = vmatprep.subr.mxu0 0.0
    %260 = vmatpush1.msra.mxu0 0.0
    %261 = vmatprep.subr.mxu0 0.0
    %262 = vmatpush1.msra.mxu0 0.0
    %263 = vmatprep.subr.mxu0 0.0
    %264 = vmatpush1.msra.mxu0 0.0
    %265 = vmatprep.subr.mxu0 0.0
    %266 = vmatpush1.msra.mxu0 0.0
    %267 = vmatprep.subr.mxu0 0.0
    %268 = vmatpush1.msra.mxu0 0.0
    %269 = vmatprep.subr.mxu0 0.0
    %270 = vmatpush1.msra.mxu0 0.0
    %271 = vmatprep.subr.mxu0 0.0
    %272 = vmatpush1.msra.mxu0 0.0
    %273 = vmatprep.subr.mxu0 0.0
    %274 = vmatpush1.msra.mxu0 0.0
    %275 = vmatprep.subr.mxu0 0.0
    %276 = vmatpush1.msra.mxu0 0.0
    %277 = vmatprep.subr.mxu0 0.0
    %278 = vmatpush1.msra.mxu0 0.0
    %279 = vmatprep.subr.mxu0 0.0
    %280 = vmatpush1.msra.mxu0 0.0
    %281 = vmatprep.subr.mxu0 0.0
    %282 = vmatpush1.msra.mxu0 0.0
    %283 = vmatprep.subr.mxu0 0.0
    %284 = vmatpush1.msra.mxu0 0.0
    %285 = vmatprep.subr.mxu0 0.0
    %286 = vmatpush1.msra.mxu0 0.0
    %287 = vmatprep.subr.mxu0 0.0
    %288 = vmatpush1.msra.mxu0 0.0
    %289 = vmatprep.subr.mxu0 0.0
    %290 = vmatpush1.msra.mxu0 0.0
    %291 = vmatprep.subr.mxu0 0.0
    %292 = vmatpush1.msra.mxu0 0.0
    %293 = vmatprep.subr.mxu0 0.0
    %294 = vmatpush1.msra.mxu0 0.0
    %295 = vmatprep.subr.mxu0 0.0
    %296 = vmatpush1.msra.mxu0 0.0
    %297 = vmatprep.subr.mxu0 0.0
    %298 = vmatpush1.msra.mxu0 0.0
    %299 = vmatprep.subr.mxu0 0.0
    %300 = vmatpush1.msra.mxu0 0.0
    %301 = vmatprep.mubr.f32.mxu0 0.0
    %302 = vmatmul.mubr.f32.gmra.mrb[0].mxu0 %v235
    %v303 = vpop.f32.mrb[0].mxu0
    %v304 = vadd.f32 0.0, %v303
    %v305 = vpop.f32.mrb[0].mxu0
    %306 = vdwg.mxu0
    %vm307 = vcmp.le.f32.partialorder %v304, 1e-08
    %v308 = vsel %vm307, 1.0, %v304
    %v309 = vrcp.pop %v308
    %v311 = vrot.slane %v190, 1
    %v314 = vsub.f32 %v93, %v190
    %v315 = vsub.f32 %v94, %v311
    %v317 = vrot.slane %v309, 1
    %v320 = vmul.f32 %v314, %v309
    %v321 = vmul.f32 %v315, %v317
    %v322 = vld [vmem:[#allocation8] sm:$0xff]
    %v323 = vld [vmem:[#allocation8 + $0x8] sm:$0xff]
    %v324 = vld [vmem:[#allocation8 + $0x10] sm:$0xff]
    %v325 = vld [vmem:[#allocation8 + $0x18] sm:$0xff]
    %v326 = vld [vmem:[%s4] sm:$0x1]
    %v328 = vlaneseq
    %v329 = vshrl.u32 %v328, 7
    %v330 = vsub.s32 0, %v329
    %v331 = vrot.slane %v326, %v330
    %v335 = vrot.slane %v321, 7
    %v336 = vsel %vm119, %v335, %v320
    %v337 = vsel %vm78, %v336, 0
    %339 = vmatprep.subr.mxu0 0.0
    %340 = vmatpush1.msra.mxu0 %v322
    %341 = vmatprep.subr.mxu0 0.0
    %342 = vmatpush1.msra.mxu0 %v323
    %343 = vmatprep.subr.mxu0 0.0
    %344 = vmatpush1.msra.mxu0 %v324
    %345 = vmatprep.subr.mxu0 0.0
    %346 = vmatpush1.msra.mxu0 %v325
    %347 = vmatprep.subr.mxu0 0.0
    %348 = vmatpush1.msra.mxu0 0.0
    %349 = vmatprep.subr.mxu0 0.0
    %350 = vmatpush1.msra.mxu0 0.0
    %351 = vmatprep.subr.mxu0 0.0
    %352 = vmatpush1.msra.mxu0 0.0
    %353 = vmatprep.subr.mxu0 0.0
    %354 = vmatpush1.msra.mxu0 0.0
    %355 = vmatprep.subr.mxu0 0.0
    %356 = vmatpush1.msra.mxu0 0.0
    %357 = vmatprep.subr.mxu0 0.0
    %358 = vmatpush1.msra.mxu0 0.0
    %359 = vmatprep.subr.mxu0 0.0
    %360 = vmatpush1.msra.mxu0 0.0
    %361 = vmatprep.subr.mxu0 0.0
    %362 = vmatpush1.msra.mxu0 0.0
    %363 = vmatprep.subr.mxu0 0.0
    %364 = vmatpush1.msra.mxu0 0.0
    %365 = vmatprep.subr.mxu0 0.0
    %366 = vmatpush1.msra.mxu0 0.0
    %367 = vmatprep.subr.mxu0 0.0
    %368 = vmatpush1.msra.mxu0 0.0
    %369 = vmatprep.subr.mxu0 0.0
    %370 = vmatpush1.msra.mxu0 0.0
    %371 = vmatprep.subr.mxu0 0.0
    %372 = vmatpush1.msra.mxu0 0.0
    %373 = vmatprep.subr.mxu0 0.0
    %374 = vmatpush1.msra.mxu0 0.0
    %375 = vmatprep.subr.mxu0 0.0
    %376 = vmatpush1.msra.mxu0 0.0
    %377 = vmatprep.subr.mxu0 0.0
    %378 = vmatpush1.msra.mxu0 0.0
    %379 = vmatprep.subr.mxu0 0.0
    %380 = vmatpush1.msra.mxu0 0.0
    %381 = vmatprep.subr.mxu0 0.0
    %382 = vmatpush1.msra.mxu0 0.0
    %383 = vmatprep.subr.mxu0 0.0
    %384 = vmatpush1.msra.mxu0 0.0
    %385 = vmatprep.subr.mxu0 0.0
    %386 = vmatpush1.msra.mxu0 0.0
    %387 = vmatprep.subr.mxu0 0.0
    %388 = vmatpush1.msra.mxu0 0.0
    %389 = vmatprep.subr.mxu0 0.0
    %390 = vmatpush1.msra.mxu0 0.0
    %391 = vmatprep.subr.mxu0 0.0
    %392 = vmatpush1.msra.mxu0 0.0
    %393 = vmatprep.subr.mxu0 0.0
    %394 = vmatpush1.msra.mxu0 0.0
    %395 = vmatprep.subr.mxu0 0.0
    %396 = vmatpush1.msra.mxu0 0.0
    %397 = vmatprep.subr.mxu0 0.0
    %398 = vmatpush1.msra.mxu0 0.0
    %399 = vmatprep.subr.mxu0 0.0
    %400 = vmatpush1.msra.mxu0 0.0
    %401 = vmatprep.subr.mxu0 0.0
    %402 = vmatpush1.msra.mxu0 0.0
    %403 = vmatprep.mubr.f32.mxu0 0.0
    %404 = vmatmul.mubr.f32.gmra.mrb[0].mxu0 %v337
    %v405 = vpop.f32.mrb[0].mxu0
    %v406 = vadd.f32 %v331, %v405
    %v407 = vpop.f32.mrb[0].mxu0
    %408 = vdwg.mxu0
    %v409 = vxor.u32 %v406, 2147483648
    %v410 = vmul.f32 %v409, 1.442695
    %v411 = vpow.pop %v410
    %v412 = vadd.f32 %v411, 1.0
    %v413 = vrcp.pop %v412
    %v414 = vmul.f32 1.0, %v413
    %v415 = vmul.f32 %v309, %v414
    %v418 = vunpack.c.l.s4 1966171168
    %v419 = vunpack.c.0.s8 %v418
    %v420 = vlaneseq
    %v421 = vshrl.u32 %v420, 7
    %v422 = vsub.s32 %v419, %v421
    %v423 = vrot.slane %v415, %v422
    %v424 = vcombine.high %v423, %v423
    %v426 = vunpack.c.l.s4 1966171168
    %v427 = vunpack.c.0.s8 %v426
    %v428 = vlaneseq
    %v429 = vshrl.u32 %v428, 7
    %v430 = vsub.s32 %v427, %v429
    %v431 = vrot.slane %v423, %v430
    %v433 = vunpack.c.l.s4 1966171168
    %v434 = vunpack.c.0.s8 %v433
    %v435 = vlaneseq
    %v436 = vshrl.u32 %v435, 7
    %v437 = vsub.s32 %v434, %v436
    %v438 = vrot.slane %v424, %v437
    %v440 = vunpack.c.l.s4 1966171168
    %v441 = vunpack.c.0.s8 %v440
    %v442 = vlaneseq
    %v443 = vshrl.u32 %v442, 7
    %v444 = vsub.s32 %v441, %v443
    %v445 = vrot.slane %v190, %v444
    %v446 = vcombine.high %v445, %v445
    %v448 = vunpack.c.l.s4 1966171168
    %v449 = vunpack.c.0.s8 %v448
    %v450 = vlaneseq
    %v451 = vshrl.u32 %v450, 7
    %v452 = vsub.s32 %v449, %v451
    %v453 = vrot.slane %v445, %v452
    %v455 = vunpack.c.l.s4 1966171168
    %v456 = vunpack.c.0.s8 %v455
    %v457 = vlaneseq
    %v458 = vshrl.u32 %v457, 7
    %v459 = vsub.s32 %v456, %v458
    %v460 = vrot.slane %v446, %v459
    %v461 = vlaneseq
    %v462 = vshrl.u32 %v461, 7
    %v463 = vsub.s32 0, %v462
    %v464 = vrot.slane %v453, %v463
    %v465 = vlaneseq
    %v466 = vshrl.u32 %v465, 7
    %v467 = vsub.s32 0, %v466
    %v468 = vrot.slane %v460, %v467
    %v471 = vsub.f32 %v76, %v464
    %v472 = vsub.f32 %v77, %v468
    %v473 = vlaneseq
    %v474 = vshrl.u32 %v473, 7
    %v475 = vsub.s32 0, %v474
    %v476 = vrot.slane %v431, %v475
    %v477 = vlaneseq
    %v478 = vshrl.u32 %v477, 7
    %v479 = vsub.s32 0, %v478
    %v480 = vrot.slane %v438, %v479
    %v483 = vmul.f32 %v471, %v476
    %v484 = vmul.f32 %v472, %v480
    %485 = vst.msk [vmem:[#allocation10] sm:$0xff] %vm78, %v483
    %486 = vst.msk [vmem:[#allocation10 + $0x8] sm:$0xff] %vm78, %v484
    // Predicated region
    $region38: #{tpu_custom_call.1} parent=1 // pred_check
      _
    $region39: #{tpu_custom_call.1} parent=1 // pred_check_branch
      %488 = sbr.rel (0) target = $region41
    $region40: #{tpu_custom_call.1} parent=1 // pred_region
      %s490 = ssub.s32 256, 256
      %491 = vsyncadd [#allocation4], %s490
      %s492 = sshll.u32 [#allocation10], 4
      %s493 = int_to_ptr.vmem [resolvable:$true] %s492
      %498 = dma.vmem_to_hbm [thread:$0]  %s493, 256, %s5, [#allocation4], 128, 128, 8
    $region41: #{tpu_custom_call.1} parent=1 // pred_fallthru
      _
    // Predicated region
    $region42: #{tpu_custom_call.1} parent=1 // pred_check
      _
    $region43: #{tpu_custom_call.1} parent=1 // pred_check_branch
      %500 = sbr.rel (0) target = $region45
    $region44: #{tpu_custom_call.1} parent=1 // pred_region
      %501 = dma.done [#allocation4], 256
    $region45: #{tpu_custom_call.1} parent=1 // pred_fallthru
      _
    %502 = vsyncpa [#allocation3], 1
    %503 = vsyncpa [#allocation6], 1
    %504 = vsyncpa [#allocation9], 1
    %505 = vsyncpa [#allocation4], 1

</llo_original>
